<compile_context>
chip_gen: v7x
topology: tpu7x:2x2x1
jax: 0.10.0
libtpu: 0.0.40
codegen_flags: <defaults>
</compile_context>

<pallas_src>
import functools

import jax
import jax.numpy as jnp
from jax.experimental import pallas as pl
from jax.experimental.pallas import tpu as pltpu


def sentiment_kernel(
    x_ref,                 # (T*B, 2E) bf16 : time-major [x_t | x_{T-1-t}]
    wx_ref,                # (2E, 8H)  bf16 : block input weight, gate-interleaved cols
    bias_ref,              # (1, 8H)   f32  : b_ih+b_hh, [i_f,i_b,f_f,f_b,g_f,g_b,o_f,o_b]
    wh_ref,                # (2H, 8H)  bf16 : block-diag recurrent weight (fwd rows 0:H, bwd rows H:2H)
    fc1w_ref, fc1b_ref,    # (2H, 64) bf16, (1, 64) f32
    fc2w_ref, fc2b_ref,    # (64, 32) bf16, (1, 32) f32
    fc3w_ref, fc3b_ref,    # (32, 128) bf16 (lane-padded), (1, 128) f32
    out_ref,               # (B, 128)  f32 (lane-dense; cols 3: are zero)
    *, T, B, H,
):
    H2 = 2 * H

    # ---- Hoisted input projection: one MXU pass gives x-gate contributions
    # for both directions, already in fused gate-interleaved column order.
    xproj = (
        jnp.dot(x_ref[...], wx_ref[...], preferred_element_type=jnp.float32)
        + bias_ref[...]
    )  # (T*B, 8H) f32

    wh = wh_ref[...]  # (2H, 8H) bf16

    h = jnp.zeros((B, H2), jnp.float32)   # [h_fwd | h_bwd]
    c = jnp.zeros((B, H2), jnp.float32)   # [c_fwd | c_bwd]

    # ---- Single fused fwd+bwd recurrence, fully unrolled (T small & static).
    # One (B, 2H) x (2H, 8H) matmul per step carries both directions.
    for t in range(T):
        g = xproj[t * B:(t + 1) * B, :] + jnp.dot(
            h.astype(jnp.bfloat16), wh, preferred_element_type=jnp.float32
        )  # (B, 8H): [i_f,i_b | f_f,f_b | g_f,g_b | o_f,o_b]

        sg = jax.nn.sigmoid(g)                   # full-width sigmoid (i, f, o used)
        gg = jnp.tanh(g[:, 2 * H2:3 * H2])       # tanh only on the g-gate columns
        c = sg[:, H2:2 * H2] * c + sg[:, :H2] * gg
        h = sg[:, 3 * H2:] * jnp.tanh(c)

    # h is already torch.cat((h_n[-2], h_n[-1]), dim=1) -> FC stack.
    z1 = jnp.maximum(
        jnp.dot(h.astype(jnp.bfloat16), fc1w_ref[...],
                preferred_element_type=jnp.float32) + fc1b_ref[...],
        0.0,
    )
    # dropout(p=0.2) -> identity at inference
    z2 = jnp.maximum(
        jnp.dot(z1.astype(jnp.bfloat16), fc2w_ref[...],
                preferred_element_type=jnp.float32) + fc2b_ref[...],
        0.0,
    )
    out = jnp.dot(z2.astype(jnp.bfloat16), fc3w_ref[...],
                  preferred_element_type=jnp.float32) + fc3b_ref[...]
    out_ref[...] = out.astype(out_ref.dtype)  # (B, 128) lane-dense store


def _interleave_gates(wf, wb, H):
    """[i_f,f_f,g_f,o_f], [i_b,f_b,g_b,o_b] -> [i_f,i_b,f_f,f_b,g_f,g_b,o_f,o_b]."""
    return jnp.concatenate(
        [w[..., g * H:(g + 1) * H] for g in range(4) for w in (wf, wb)],
        axis=-1,
    )


def sentiment_forward(tokens, params):
    """tokens: (B, T) int32. Returns logits (B, 3)."""
    B, T = tokens.shape
    E = params["embedding"].shape[1]
    H = params["whh_f"].shape[0]
    H4 = 4 * H

    # Pad batch to the f32 sublane count (8); padded rows are dropped at the end.
    B_pad = max(8, ((B + 7) // 8) * 8)
    tok_tb = jnp.transpose(tokens)                      # (T, B) sequence-major gather
    if B_pad != B:
        tok_tb = jnp.pad(tok_tb, ((0, 0), (0, B_pad - B)))

    x_fwd = params["embedding"][tok_tb]                 # (T, B_pad, E)
    x_bwd = x_fwd[::-1]                                 # reversed time for bwd direction
    x = jnp.concatenate([x_fwd, x_bwd], axis=-1).reshape(
        T * B_pad, 2 * E).astype(jnp.bfloat16)          # (T*B, 2E)

    bf16 = lambda a: a.astype(jnp.bfloat16)
    zE = jnp.zeros((E, H4), jnp.float32)
    zH = jnp.zeros((H, H4), jnp.float32)
    # Input weight: rows 0:E hit fwd gate columns, rows E:2E hit bwd gate columns.
    wx = _interleave_gates(jnp.concatenate([params["wih_f"], zE], axis=0),
                           jnp.concatenate([zE, params["wih_b"]], axis=0), H)   # (2E, 8H)
    # Block-diagonal recurrent weight: h_f rows drive fwd gates, h_b rows drive bwd.
    wh = _interleave_gates(jnp.concatenate([params["whh_f"], zH], axis=0),
                           jnp.concatenate([zH, params["whh_b"]], axis=0), H)   # (2H, 8H)
    bias = _interleave_gates(params["b_f"], params["b_b"], H)                   # (1, 8H)

    # Lane-dense fc3: pad the 3-wide output to 128 lanes (zeros), slice after.
    fc3_w = jnp.zeros((params["fc3_w"].shape[0], 128), jnp.float32).at[:, :3].set(params["fc3_w"])
    fc3_b = jnp.zeros((1, 128), jnp.float32).at[:, :3].set(params["fc3_b"])

    args = (
        x, bf16(wx), bias, bf16(wh),
        bf16(params["fc1_w"]), params["fc1_b"],
        bf16(params["fc2_w"]), params["fc2_b"],
        bf16(fc3_w), fc3_b,
    )
    vmem = pl.BlockSpec(memory_space=pltpu.MemorySpace.VMEM)
    out = pl.pallas_call(
        functools.partial(sentiment_kernel, T=T, B=B_pad, H=H),
        out_shape=jax.ShapeDtypeStruct((B_pad, 128), jnp.float32),
        in_specs=[vmem] * len(args),
        out_specs=vmem,
        # TODO(synk): for large serving batches, add a grid over the batch dim
        # with dimension_semantics=("parallel",) to use both v7x TensorCores.
    )(*args)
    return out[:B, :3]


# ------------------------- pure-JAX (f32) reference -------------------------
def reference_forward(tokens, params):
    emb = params["embedding"][tokens]  # (B, T, E)
    B, T, E = emb.shape
    H = params["whh_f"].shape[0]

    def run_dir(w_ih, w_hh, b, reverse):
        h = jnp.zeros((B, H), jnp.float32)
        c = jnp.zeros((B, H), jnp.float32)
        order = range(T - 1, -1, -1) if reverse else range(T)
        for t in order:
            gates = emb[:, t, :] @ w_ih + h @ w_hh + b
            i_g = jax.nn.sigmoid(gates[:, 0 * H:1 * H])
            f_g = jax.nn.sigmoid(gates[:, 1 * H:2 * H])
            g_g = jnp.tanh(gates[:, 2 * H:3 * H])
            o_g = jax.nn.sigmoid(gates[:, 3 * H:4 * H])
            c = f_g * c + i_g * g_g
            h = o_g * jnp.tanh(c)
        return h

    h_f = run_dir(params["wih_f"], params["whh_f"], params["b_f"], False)
    h_b = run_dir(params["wih_b"], params["whh_b"], params["b_b"], True)
    h_cat = jnp.concatenate([h_f, h_b], axis=1)
    z1 = jnp.maximum(h_cat @ params["fc1_w"] + params["fc1_b"], 0.0)
    z2 = jnp.maximum(z1 @ params["fc2_w"] + params["fc2_b"], 0.0)
    return z2 @ params["fc3_w"] + params["fc3_b"]


# ------------------------- deterministic params ------------------------------
def make_params(key, vocab_size, E=16, H=32):
    ks = jax.random.split(key, 16)
    u = lambda k, shape, s: jax.random.uniform(k, shape, jnp.float32, -s, s)
    s_lstm = 1.0 / jnp.sqrt(H)
    s_fc1 = 1.0 / jnp.sqrt(2 * H)
    s_fc2 = 1.0 / jnp.sqrt(64)
    s_fc3 = 1.0 / jnp.sqrt(32)
    return {
        "embedding": jax.random.normal(ks[0], (vocab_size, E), jnp.float32),
        # LSTM weights stored pre-transposed: x @ W_ih (E,4H), h @ W_hh (H,4H);
        # bias = b_ih + b_hh kept as (1,4H). PyTorch gate order i,f,g,o.
        "wih_f": u(ks[1], (E, 4 * H), s_lstm),
        "whh_f": u(ks[2], (H, 4 * H), s_lstm),
        "b_f": u(ks[3], (1, 4 * H), s_lstm),
        "wih_b": u(ks[4], (E, 4 * H), s_lstm),
        "whh_b": u(ks[5], (H, 4 * H), s_lstm),
        "b_b": u(ks[6], (1, 4 * H), s_lstm),
        "fc1_w": u(ks[7], (2 * H, 64), s_fc1),
        "fc1_b": u(ks[8], (1, 64), s_fc1),
        "fc2_w": u(ks[9], (64, 32), s_fc2),
        "fc2_b": u(ks[10], (1, 32), s_fc2),
        "fc3_w": u(ks[11], (32, 3), s_fc3),
        "fc3_b": u(ks[12], (1, 3), s_fc3),
    }


if __name__ == "__main__":
    key = jax.random.PRNGKey(0)
    k_tok, k_par = jax.random.split(key)

    VOCAB, B, T = 50, 2, 8
    tokens = jax.random.randint(k_tok, (B, T), 0, VOCAB, dtype=jnp.int32)
    params = make_params(k_par, VOCAB)

    out = sentiment_forward(tokens, params)
    out = jax.block_until_ready(out)

    ref = reference_forward(tokens, params)
    assert out.shape == (B, 3)
    # Kernel feeds the MXU bf16 operands (f32 accumulation); tolerance sized for that.
    assert jnp.allclose(out, ref, atol=2e-2, rtol=2e-2), (out, ref)
    print("KERNEL_OK")
</pallas_src>

<mosaic_0001>
module attributes {stable_mosaic.version = 11 : i64} {
  func.func @sentiment_kernel(%arg0: memref<64x32xbf16, #tpu.memory_space<vmem>>, %arg1: memref<32x256xbf16, #tpu.memory_space<vmem>>, %arg2: memref<1x256xf32, #tpu.memory_space<vmem>>, %arg3: memref<64x256xbf16, #tpu.memory_space<vmem>>, %arg4: memref<64x64xbf16, #tpu.memory_space<vmem>>, %arg5: memref<1x64xf32, #tpu.memory_space<vmem>>, %arg6: memref<64x32xbf16, #tpu.memory_space<vmem>>, %arg7: memref<1x32xf32, #tpu.memory_space<vmem>>, %arg8: memref<32x128xbf16, #tpu.memory_space<vmem>>, %arg9: memref<1x128xf32, #tpu.memory_space<vmem>>, %arg10: memref<8x128xf32, #tpu.memory_space<vmem>>) attributes {dimension_semantics = [], scalar_prefetch = 0 : i64, scratch_operands = 0 : i64, tpu.core_type = #tpu.core_type<tc>} {
    %c0 = arith.constant 0 : index
    %c0_0 = arith.constant 0 : index
    %0 = vector.load %arg0[%c0, %c0_0] : memref<64x32xbf16, #tpu.memory_space<vmem>>, vector<64x32xbf16>
    %c0_1 = arith.constant 0 : index
    %c0_2 = arith.constant 0 : index
    %1 = vector.load %arg1[%c0_1, %c0_2] : memref<32x256xbf16, #tpu.memory_space<vmem>>, vector<32x256xbf16>
    %cst = arith.constant dense<0.000000e+00> : vector<64x256xf32>
    %2 = tpu.matmul %0, %1, %cst {dimension_numbers = #tpu.dot_dimension_numbers<[1], [0], [0], [1], [0, 0, 1, 1], [], []>} : vector<64x32xbf16>, vector<32x256xbf16>, vector<64x256xf32> -> vector<64x256xf32>
    %c0_3 = arith.constant 0 : index
    %c0_4 = arith.constant 0 : index
    %3 = vector.load %arg2[%c0_3, %c0_4] : memref<1x256xf32, #tpu.memory_space<vmem>>, vector<1x256xf32>
    %4 = vector.broadcast %3 : vector<1x256xf32> to vector<64x256xf32>
    %5 = arith.addf %2, %4 : vector<64x256xf32>
    %c0_5 = arith.constant 0 : index
    %c0_6 = arith.constant 0 : index
    %6 = vector.load %arg3[%c0_5, %c0_6] : memref<64x256xbf16, #tpu.memory_space<vmem>>, vector<64x256xbf16>
    %cst_7 = arith.constant 0.000000e+00 : f32
    %7 = vector.broadcast %cst_7 : f32 to vector<8x64xf32>
    %cst_8 = arith.constant 0.000000e+00 : f32
    %8 = vector.broadcast %cst_8 : f32 to vector<8x64xf32>
    %9 = vector.extract_strided_slice %5 {offsets = [0, 0], sizes = [8, 256], strides = [1, 1]} : vector<64x256xf32> to vector<8x256xf32>
    %10 = arith.truncf %7 : vector<8x64xf32> to vector<8x64xbf16>
    %cst_9 = arith.constant dense<0.000000e+00> : vector<8x256xf32>
    %11 = tpu.matmul %10, %6, %cst_9 {dimension_numbers = #tpu.dot_dimension_numbers<[1], [0], [0], [1], [0, 0, 1, 1], [], []>} : vector<8x64xbf16>, vector<64x256xbf16>, vector<8x256xf32> -> vector<8x256xf32>
    %12 = arith.addf %9, %11 : vector<8x256xf32>
    %13 = arith.negf %12 : vector<8x256xf32>
    %14 = math.exp %13 : vector<8x256xf32>
    %cst_10 = arith.constant 1.000000e+00 : f32
    %15 = vector.broadcast %cst_10 : f32 to vector<8x256xf32>
    %16 = arith.addf %15, %14 : vector<8x256xf32>
    %17 = arith.divf %15, %16 : vector<8x256xf32>
    %18 = vector.extract_strided_slice %12 {offsets = [0, 128], sizes = [8, 64], strides = [1, 1]} : vector<8x256xf32> to vector<8x64xf32>
    %19 = math.tanh %18 : vector<8x64xf32>
    %20 = vector.extract_strided_slice %17 {offsets = [0, 64], sizes = [8, 64], strides = [1, 1]} : vector<8x256xf32> to vector<8x64xf32>
    %21 = arith.mulf %20, %8 : vector<8x64xf32>
    %22 = vector.extract_strided_slice %17 {offsets = [0, 0], sizes = [8, 64], strides = [1, 1]} : vector<8x256xf32> to vector<8x64xf32>
    %23 = arith.mulf %22, %19 : vector<8x64xf32>
    %24 = arith.addf %21, %23 : vector<8x64xf32>
    %25 = vector.extract_strided_slice %17 {offsets = [0, 192], sizes = [8, 64], strides = [1, 1]} : vector<8x256xf32> to vector<8x64xf32>
    %26 = math.tanh %24 : vector<8x64xf32>
    %27 = arith.mulf %25, %26 : vector<8x64xf32>
    %28 = vector.extract_strided_slice %5 {offsets = [8, 0], sizes = [8, 256], strides = [1, 1]} : vector<64x256xf32> to vector<8x256xf32>
    %29 = arith.truncf %27 : vector<8x64xf32> to vector<8x64xbf16>
    %cst_11 = arith.constant dense<0.000000e+00> : vector<8x256xf32>
    %30 = tpu.matmul %29, %6, %cst_11 {dimension_numbers = #tpu.dot_dimension_numbers<[1], [0], [0], [1], [0, 0, 1, 1], [], []>} : vector<8x64xbf16>, vector<64x256xbf16>, vector<8x256xf32> -> vector<8x256xf32>
    %31 = arith.addf %28, %30 : vector<8x256xf32>
    %32 = arith.negf %31 : vector<8x256xf32>
    %33 = math.exp %32 : vector<8x256xf32>
    %cst_12 = arith.constant 1.000000e+00 : f32
    %34 = vector.broadcast %cst_12 : f32 to vector<8x256xf32>
    %35 = arith.addf %34, %33 : vector<8x256xf32>
    %36 = arith.divf %34, %35 : vector<8x256xf32>
    %37 = vector.extract_strided_slice %31 {offsets = [0, 128], sizes = [8, 64], strides = [1, 1]} : vector<8x256xf32> to vector<8x64xf32>
    %38 = math.tanh %37 : vector<8x64xf32>
    %39 = vector.extract_strided_slice %36 {offsets = [0, 64], sizes = [8, 64], strides = [1, 1]} : vector<8x256xf32> to vector<8x64xf32>
    %40 = arith.mulf %39, %24 : vector<8x64xf32>
    %41 = vector.extract_strided_slice %36 {offsets = [0, 0], sizes = [8, 64], strides = [1, 1]} : vector<8x256xf32> to vector<8x64xf32>
    %42 = arith.mulf %41, %38 : vector<8x64xf32>
    %43 = arith.addf %40, %42 : vector<8x64xf32>
    %44 = vector.extract_strided_slice %36 {offsets = [0, 192], sizes = [8, 64], strides = [1, 1]} : vector<8x256xf32> to vector<8x64xf32>
    %45 = math.tanh %43 : vector<8x64xf32>
    %46 = arith.mulf %44, %45 : vector<8x64xf32>
    %47 = vector.extract_strided_slice %5 {offsets = [16, 0], sizes = [8, 256], strides = [1, 1]} : vector<64x256xf32> to vector<8x256xf32>
    %48 = arith.truncf %46 : vector<8x64xf32> to vector<8x64xbf16>
    %cst_13 = arith.constant dense<0.000000e+00> : vector<8x256xf32>
    %49 = tpu.matmul %48, %6, %cst_13 {dimension_numbers = #tpu.dot_dimension_numbers<[1], [0], [0], [1], [0, 0, 1, 1], [], []>} : vector<8x64xbf16>, vector<64x256xbf16>, vector<8x256xf32> -> vector<8x256xf32>
    %50 = arith.addf %47, %49 : vector<8x256xf32>
    %51 = arith.negf %50 : vector<8x256xf32>
    %52 = math.exp %51 : vector<8x256xf32>
    %cst_14 = arith.constant 1.000000e+00 : f32
    %53 = vector.broadcast %cst_14 : f32 to vector<8x256xf32>
    %54 = arith.addf %53, %52 : vector<8x256xf32>
    %55 = arith.divf %53, %54 : vector<8x256xf32>
    %56 = vector.extract_strided_slice %50 {offsets = [0, 128], sizes = [8, 64], strides = [1, 1]} : vector<8x256xf32> to vector<8x64xf32>
    %57 = math.tanh %56 : vector<8x64xf32>
    %58 = vector.extract_strided_slice %55 {offsets = [0, 64], sizes = [8, 64], strides = [1, 1]} : vector<8x256xf32> to vector<8x64xf32>
    %59 = arith.mulf %58, %43 : vector<8x64xf32>
    %60 = vector.extract_strided_slice %55 {offsets = [0, 0], sizes = [8, 64], strides = [1, 1]} : vector<8x256xf32> to vector<8x64xf32>
    %61 = arith.mulf %60, %57 : vector<8x64xf32>
    %62 = arith.addf %59, %61 : vector<8x64xf32>
    %63 = vector.extract_strided_slice %55 {offsets = [0, 192], sizes = [8, 64], strides = [1, 1]} : vector<8x256xf32> to vector<8x64xf32>
    %64 = math.tanh %62 : vector<8x64xf32>
    %65 = arith.mulf %63, %64 : vector<8x64xf32>
    %66 = vector.extract_strided_slice %5 {offsets = [24, 0], sizes = [8, 256], strides = [1, 1]} : vector<64x256xf32> to vector<8x256xf32>
    %67 = arith.truncf %65 : vector<8x64xf32> to vector<8x64xbf16>
    %cst_15 = arith.constant dense<0.000000e+00> : vector<8x256xf32>
    %68 = tpu.matmul %67, %6, %cst_15 {dimension_numbers = #tpu.dot_dimension_numbers<[1], [0], [0], [1], [0, 0, 1, 1], [], []>} : vector<8x64xbf16>, vector<64x256xbf16>, vector<8x256xf32> -> vector<8x256xf32>
    %69 = arith.addf %66, %68 : vector<8x256xf32>
    %70 = arith.negf %69 : vector<8x256xf32>
    %71 = math.exp %70 : vector<8x256xf32>
    %cst_16 = arith.constant 1.000000e+00 : f32
    %72 = vector.broadcast %cst_16 : f32 to vector<8x256xf32>
    %73 = arith.addf %72, %71 : vector<8x256xf32>
    %74 = arith.divf %72, %73 : vector<8x256xf32>
    %75 = vector.extract_strided_slice %69 {offsets = [0, 128], sizes = [8, 64], strides = [1, 1]} : vector<8x256xf32> to vector<8x64xf32>
    %76 = math.tanh %75 : vector<8x64xf32>
    %77 = vector.extract_strided_slice %74 {offsets = [0, 64], sizes = [8, 64], strides = [1, 1]} : vector<8x256xf32> to vector<8x64xf32>
    %78 = arith.mulf %77, %62 : vector<8x64xf32>
    %79 = vector.extract_strided_slice %74 {offsets = [0, 0], sizes = [8, 64], strides = [1, 1]} : vector<8x256xf32> to vector<8x64xf32>
    %80 = arith.mulf %79, %76 : vector<8x64xf32>
    %81 = arith.addf %78, %80 : vector<8x64xf32>
    %82 = vector.extract_strided_slice %74 {offsets = [0, 192], sizes = [8, 64], strides = [1, 1]} : vector<8x256xf32> to vector<8x64xf32>
    %83 = math.tanh %81 : vector<8x64xf32>
    %84 = arith.mulf %82, %83 : vector<8x64xf32>
    %85 = vector.extract_strided_slice %5 {offsets = [32, 0], sizes = [8, 256], strides = [1, 1]} : vector<64x256xf32> to vector<8x256xf32>
    %86 = arith.truncf %84 : vector<8x64xf32> to vector<8x64xbf16>
    %cst_17 = arith.constant dense<0.000000e+00> : vector<8x256xf32>
    %87 = tpu.matmul %86, %6, %cst_17 {dimension_numbers = #tpu.dot_dimension_numbers<[1], [0], [0], [1], [0, 0, 1, 1], [], []>} : vector<8x64xbf16>, vector<64x256xbf16>, vector<8x256xf32> -> vector<8x256xf32>
    %88 = arith.addf %85, %87 : vector<8x256xf32>
    %89 = arith.negf %88 : vector<8x256xf32>
    %90 = math.exp %89 : vector<8x256xf32>
    %cst_18 = arith.constant 1.000000e+00 : f32
    %91 = vector.broadcast %cst_18 : f32 to vector<8x256xf32>
    %92 = arith.addf %91, %90 : vector<8x256xf32>
    %93 = arith.divf %91, %92 : vector<8x256xf32>
    %94 = vector.extract_strided_slice %88 {offsets = [0, 128], sizes = [8, 64], strides = [1, 1]} : vector<8x256xf32> to vector<8x64xf32>
    %95 = math.tanh %94 : vector<8x64xf32>
    %96 = vector.extract_strided_slice %93 {offsets = [0, 64], sizes = [8, 64], strides = [1, 1]} : vector<8x256xf32> to vector<8x64xf32>
    %97 = arith.mulf %96, %81 : vector<8x64xf32>
    %98 = vector.extract_strided_slice %93 {offsets = [0, 0], sizes = [8, 64], strides = [1, 1]} : vector<8x256xf32> to vector<8x64xf32>
    %99 = arith.mulf %98, %95 : vector<8x64xf32>
    %100 = arith.addf %97, %99 : vector<8x64xf32>
    %101 = vector.extract_strided_slice %93 {offsets = [0, 192], sizes = [8, 64], strides = [1, 1]} : vector<8x256xf32> to vector<8x64xf32>
    %102 = math.tanh %100 : vector<8x64xf32>
    %103 = arith.mulf %101, %102 : vector<8x64xf32>
    %104 = vector.extract_strided_slice %5 {offsets = [40, 0], sizes = [8, 256], strides = [1, 1]} : vector<64x256xf32> to vector<8x256xf32>
    %105 = arith.truncf %103 : vector<8x64xf32> to vector<8x64xbf16>
    %cst_19 = arith.constant dense<0.000000e+00> : vector<8x256xf32>
    %106 = tpu.matmul %105, %6, %cst_19 {dimension_numbers = #tpu.dot_dimension_numbers<[1], [0], [0], [1], [0, 0, 1, 1], [], []>} : vector<8x64xbf16>, vector<64x256xbf16>, vector<8x256xf32> -> vector<8x256xf32>
    %107 = arith.addf %104, %106 : vector<8x256xf32>
    %108 = arith.negf %107 : vector<8x256xf32>
    %109 = math.exp %108 : vector<8x256xf32>
    %cst_20 = arith.constant 1.000000e+00 : f32
    %110 = vector.broadcast %cst_20 : f32 to vector<8x256xf32>
    %111 = arith.addf %110, %109 : vector<8x256xf32>
    %112 = arith.divf %110, %111 : vector<8x256xf32>
    %113 = vector.extract_strided_slice %107 {offsets = [0, 128], sizes = [8, 64], strides = [1, 1]} : vector<8x256xf32> to vector<8x64xf32>
    %114 = math.tanh %113 : vector<8x64xf32>
    %115 = vector.extract_strided_slice %112 {offsets = [0, 64], sizes = [8, 64], strides = [1, 1]} : vector<8x256xf32> to vector<8x64xf32>
    %116 = arith.mulf %115, %100 : vector<8x64xf32>
    %117 = vector.extract_strided_slice %112 {offsets = [0, 0], sizes = [8, 64], strides = [1, 1]} : vector<8x256xf32> to vector<8x64xf32>
    %118 = arith.mulf %117, %114 : vector<8x64xf32>
    %119 = arith.addf %116, %118 : vector<8x64xf32>
    %120 = vector.extract_strided_slice %112 {offsets = [0, 192], sizes = [8, 64], strides = [1, 1]} : vector<8x256xf32> to vector<8x64xf32>
    %121 = math.tanh %119 : vector<8x64xf32>
    %122 = arith.mulf %120, %121 : vector<8x64xf32>
    %123 = vector.extract_strided_slice %5 {offsets = [48, 0], sizes = [8, 256], strides = [1, 1]} : vector<64x256xf32> to vector<8x256xf32>
    %124 = arith.truncf %122 : vector<8x64xf32> to vector<8x64xbf16>
    %cst_21 = arith.constant dense<0.000000e+00> : vector<8x256xf32>
    %125 = tpu.matmul %124, %6, %cst_21 {dimension_numbers = #tpu.dot_dimension_numbers<[1], [0], [0], [1], [0, 0, 1, 1], [], []>} : vector<8x64xbf16>, vector<64x256xbf16>, vector<8x256xf32> -> vector<8x256xf32>
    %126 = arith.addf %123, %125 : vector<8x256xf32>
    %127 = arith.negf %126 : vector<8x256xf32>
    %128 = math.exp %127 : vector<8x256xf32>
    %cst_22 = arith.constant 1.000000e+00 : f32
    %129 = vector.broadcast %cst_22 : f32 to vector<8x256xf32>
    %130 = arith.addf %129, %128 : vector<8x256xf32>
    %131 = arith.divf %129, %130 : vector<8x256xf32>
    %132 = vector.extract_strided_slice %126 {offsets = [0, 128], sizes = [8, 64], strides = [1, 1]} : vector<8x256xf32> to vector<8x64xf32>
    %133 = math.tanh %132 : vector<8x64xf32>
    %134 = vector.extract_strided_slice %131 {offsets = [0, 64], sizes = [8, 64], strides = [1, 1]} : vector<8x256xf32> to vector<8x64xf32>
    %135 = arith.mulf %134, %119 : vector<8x64xf32>
    %136 = vector.extract_strided_slice %131 {offsets = [0, 0], sizes = [8, 64], strides = [1, 1]} : vector<8x256xf32> to vector<8x64xf32>
    %137 = arith.mulf %136, %133 : vector<8x64xf32>
    %138 = arith.addf %135, %137 : vector<8x64xf32>
    %139 = vector.extract_strided_slice %131 {offsets = [0, 192], sizes = [8, 64], strides = [1, 1]} : vector<8x256xf32> to vector<8x64xf32>
    %140 = math.tanh %138 : vector<8x64xf32>
    %141 = arith.mulf %139, %140 : vector<8x64xf32>
    %142 = vector.extract_strided_slice %5 {offsets = [56, 0], sizes = [8, 256], strides = [1, 1]} : vector<64x256xf32> to vector<8x256xf32>
    %143 = arith.truncf %141 : vector<8x64xf32> to vector<8x64xbf16>
    %cst_23 = arith.constant dense<0.000000e+00> : vector<8x256xf32>
    %144 = tpu.matmul %143, %6, %cst_23 {dimension_numbers = #tpu.dot_dimension_numbers<[1], [0], [0], [1], [0, 0, 1, 1], [], []>} : vector<8x64xbf16>, vector<64x256xbf16>, vector<8x256xf32> -> vector<8x256xf32>
    %145 = arith.addf %142, %144 : vector<8x256xf32>
    %146 = arith.negf %145 : vector<8x256xf32>
    %147 = math.exp %146 : vector<8x256xf32>
    %cst_24 = arith.constant 1.000000e+00 : f32
    %148 = vector.broadcast %cst_24 : f32 to vector<8x256xf32>
    %149 = arith.addf %148, %147 : vector<8x256xf32>
    %150 = arith.divf %148, %149 : vector<8x256xf32>
    %151 = vector.extract_strided_slice %145 {offsets = [0, 128], sizes = [8, 64], strides = [1, 1]} : vector<8x256xf32> to vector<8x64xf32>
    %152 = math.tanh %151 : vector<8x64xf32>
    %153 = vector.extract_strided_slice %150 {offsets = [0, 64], sizes = [8, 64], strides = [1, 1]} : vector<8x256xf32> to vector<8x64xf32>
    %154 = arith.mulf %153, %138 : vector<8x64xf32>
    %155 = vector.extract_strided_slice %150 {offsets = [0, 0], sizes = [8, 64], strides = [1, 1]} : vector<8x256xf32> to vector<8x64xf32>
    %156 = arith.mulf %155, %152 : vector<8x64xf32>
    %157 = arith.addf %154, %156 : vector<8x64xf32>
    %158 = vector.extract_strided_slice %150 {offsets = [0, 192], sizes = [8, 64], strides = [1, 1]} : vector<8x256xf32> to vector<8x64xf32>
    %159 = math.tanh %157 : vector<8x64xf32>
    %160 = arith.mulf %158, %159 : vector<8x64xf32>
    %161 = arith.truncf %160 : vector<8x64xf32> to vector<8x64xbf16>
    %c0_25 = arith.constant 0 : index
    %c0_26 = arith.constant 0 : index
    %162 = vector.load %arg4[%c0_25, %c0_26] : memref<64x64xbf16, #tpu.memory_space<vmem>>, vector<64x64xbf16>
    %cst_27 = arith.constant dense<0.000000e+00> : vector<8x64xf32>
    %163 = tpu.matmul %161, %162, %cst_27 {dimension_numbers = #tpu.dot_dimension_numbers<[1], [0], [0], [1], [0, 0, 1, 1], [], []>} : vector<8x64xbf16>, vector<64x64xbf16>, vector<8x64xf32> -> vector<8x64xf32>
    %c0_28 = arith.constant 0 : index
    %c0_29 = arith.constant 0 : index
    %164 = vector.load %arg5[%c0_28, %c0_29] : memref<1x64xf32, #tpu.memory_space<vmem>>, vector<1x64xf32>
    %165 = vector.broadcast %164 : vector<1x64xf32> to vector<8x64xf32>
    %166 = arith.addf %163, %165 : vector<8x64xf32>
    %cst_30 = arith.constant 0.000000e+00 : f32
    %167 = vector.broadcast %cst_30 : f32 to vector<8x64xf32>
    %168 = arith.maximumf %166, %167 : vector<8x64xf32>
    %169 = arith.truncf %168 : vector<8x64xf32> to vector<8x64xbf16>
    %c0_31 = arith.constant 0 : index
    %c0_32 = arith.constant 0 : index
    %170 = vector.load %arg6[%c0_31, %c0_32] : memref<64x32xbf16, #tpu.memory_space<vmem>>, vector<64x32xbf16>
    %cst_33 = arith.constant dense<0.000000e+00> : vector<8x32xf32>
    %171 = tpu.matmul %169, %170, %cst_33 {dimension_numbers = #tpu.dot_dimension_numbers<[1], [0], [0], [1], [0, 0, 1, 1], [], []>} : vector<8x64xbf16>, vector<64x32xbf16>, vector<8x32xf32> -> vector<8x32xf32>
    %c0_34 = arith.constant 0 : index
    %c0_35 = arith.constant 0 : index
    %172 = vector.load %arg7[%c0_34, %c0_35] : memref<1x32xf32, #tpu.memory_space<vmem>>, vector<1x32xf32>
    %173 = vector.broadcast %172 : vector<1x32xf32> to vector<8x32xf32>
    %174 = arith.addf %171, %173 : vector<8x32xf32>
    %cst_36 = arith.constant 0.000000e+00 : f32
    %175 = vector.broadcast %cst_36 : f32 to vector<8x32xf32>
    %176 = arith.maximumf %174, %175 : vector<8x32xf32>
    %177 = arith.truncf %176 : vector<8x32xf32> to vector<8x32xbf16>
    %c0_37 = arith.constant 0 : index
    %c0_38 = arith.constant 0 : index
    %178 = vector.load %arg8[%c0_37, %c0_38] : memref<32x128xbf16, #tpu.memory_space<vmem>>, vector<32x128xbf16>
    %cst_39 = arith.constant dense<0.000000e+00> : vector<8x128xf32>
    %179 = tpu.matmul %177, %178, %cst_39 {dimension_numbers = #tpu.dot_dimension_numbers<[1], [0], [0], [1], [0, 0, 1, 1], [], []>} : vector<8x32xbf16>, vector<32x128xbf16>, vector<8x128xf32> -> vector<8x128xf32>
    %c0_40 = arith.constant 0 : index
    %c0_41 = arith.constant 0 : index
    %180 = vector.load %arg9[%c0_40, %c0_41] : memref<1x128xf32, #tpu.memory_space<vmem>>, vector<1x128xf32>
    %181 = vector.broadcast %180 : vector<1x128xf32> to vector<8x128xf32>
    %182 = arith.addf %179, %181 : vector<8x128xf32>
    %c0_42 = arith.constant 0 : index
    %c0_43 = arith.constant 0 : index
    %183 = vector.load %arg10[%c0_42, %c0_43] : memref<8x128xf32, #tpu.memory_space<vmem>>, vector<8x128xf32>
    tpu.vector_store %arg10[%c0_42, %c0_43], %182 {strides = array<i32>} : memref<8x128xf32, #tpu.memory_space<vmem>>, vector<8x128xf32>,
    return
  }
}

</mosaic_0001>

<llo_original>
// kernel: tpu_custom_call.1
$region0: #{tpu_custom_call.1}
  #allocation0 [shape = 'u32[]', space=smem, size = 0x4, offset = 0x4, fixed_abs, tag = 'smem constant byte address 0x4 - core index']
  #allocation1 [shape = 'u32[144,128]{1,0:T(1,128)}', space=vmem, size = 0x12000, scoped, tag = 'internal scratch']
  %s0 = inlined_call_operand.vmem [shape: bf16[64,32], index: 0, kind: input, shape index: {}]
  %s1 = inlined_call_operand.vmem [shape: bf16[32,256], index: 1, kind: input, shape index: {}]
  %s2 = inlined_call_operand.vmem [shape: f32[1,256], index: 2, kind: input, shape index: {}]
  %s3 = inlined_call_operand.vmem [shape: bf16[64,256], index: 3, kind: input, shape index: {}]
  %s4 = inlined_call_operand.hbm [shape: bf16[64,64], index: 4, kind: input, shape index: {}]
  %s5 = inlined_call_operand.hbm [shape: f32[1,64], index: 5, kind: input, shape index: {}]
  %s6 = inlined_call_operand.vmem [shape: bf16[64,32], index: 6, kind: input, shape index: {}]
  %s7 = inlined_call_operand.vmem [shape: f32[1,32], index: 7, kind: input, shape index: {}]
  %s8 = inlined_call_operand.hbm [shape: bf16[32,128], index: 8, kind: input, shape index: {}]
  %s9 = inlined_call_operand.vmem [shape: f32[1,128], index: 9, kind: input, shape index: {}]
  %s10 = inlined_call_operand.hbm [shape: f32[8,128], index: 10, kind: output, shape index: {}]
  %s11 = sld [smem:[#allocation0]]
  $region62: #{tpu_custom_call.1} parent=0
    _
  %s13 = ssub.s32 1, %s11
  %s14 = scalar_select 0, %s13, %s11
  $region1: #{tpu_custom_call.1} parent=0
    #allocation2 [shape = 'u8[16384]{0}', space=vmem, size = 0x4000, scoped, tag = 'input window, operand 4, single buffered']
    #allocation3 [shape = 's32[1]{0}', space=sflag, size = 0x4, scoped, tag = 'scoped memory for tpu_custom_call.1']
    #allocation4 [shape = 's32[1]{0}', space=sflag, size = 0x4, scoped, tag = 'scoped memory for tpu_custom_call.1']
    #allocation5 [shape = 'u8[512]{0}', space=vmem, size = 0x400, scoped, tag = 'input window, operand 5, single buffered']
    #allocation6 [shape = 's32[1]{0}', space=sflag, size = 0x4, scoped, tag = 'scoped memory for tpu_custom_call.1']
    #allocation7 [shape = 'u8[8192]{0}', space=vmem, size = 0x2000, scoped, tag = 'input window, operand 8, single buffered']
    #allocation8 [shape = 'u8[4096]{0}', space=vmem, size = 0x1000, scoped, tag = 'output window, operand 0, single buffered']
    %15 = vsyncpa [#allocation3], 0
    %16 = vsyncpa [#allocation6], 0
    %17 = vsyncpa [#allocation4], 0
    // Predicated region
    $region2: #{tpu_custom_call.1} parent=1 // pred_check
      _
    $region3: #{tpu_custom_call.1} parent=1 // pred_check_branch
      %19 = sbr.rel (0) target = $region5
    $region4: #{tpu_custom_call.1} parent=1 // pred_region
      _
    $region5: #{tpu_custom_call.1} parent=1 // pred_fallthru
      _
    // Predicated region
    $region6: #{tpu_custom_call.1} parent=1 // pred_check
      _
    $region7: #{tpu_custom_call.1} parent=1 // pred_check_branch
      %21 = sbr.rel (0) target = $region9
    $region8: #{tpu_custom_call.1} parent=1 // pred_region
      _
    $region9: #{tpu_custom_call.1} parent=1 // pred_fallthru
      _
    // Predicated region
    $region10: #{tpu_custom_call.1} parent=1 // pred_check
      _
    $region11: #{tpu_custom_call.1} parent=1 // pred_check_branch
      %23 = sbr.rel (0) target = $region13
    $region12: #{tpu_custom_call.1} parent=1 // pred_region
      _
    $region13: #{tpu_custom_call.1} parent=1 // pred_fallthru
      _
    // Predicated region
    $region14: #{tpu_custom_call.1} parent=1 // pred_check
      _
    $region15: #{tpu_custom_call.1} parent=1 // pred_check_branch
      %25 = sbr.rel (0) target = $region17
    $region16: #{tpu_custom_call.1} parent=1 // pred_region
      _
    $region17: #{tpu_custom_call.1} parent=1 // pred_fallthru
      _
    // Predicated region
    $region18: #{tpu_custom_call.1} parent=1 // pred_check
      _
    $region19: #{tpu_custom_call.1} parent=1 // pred_check_branch
      %27 = sbr.rel (0) target = $region21
    $region20: #{tpu_custom_call.1} parent=1 // pred_region
      %s29 = ssub.s32 512, 512
      %30 = vsyncadd [#allocation3], %s29
      %s31 = sshll.u32 [#allocation2], 4
      %s32 = int_to_ptr.vmem [resolvable:$true] %s31
      %37 = dma.hbm_to_vmem [thread:$0]  %s4, 512, %s32, [#allocation3], 64, 64, 4
    $region21: #{tpu_custom_call.1} parent=1 // pred_fallthru
      _
    // Predicated region
    $region22: #{tpu_custom_call.1} parent=1 // pred_check
      _
    $region23: #{tpu_custom_call.1} parent=1 // pred_check_branch
      %39 = sbr.rel (0) target = $region25
    $region24: #{tpu_custom_call.1} parent=1 // pred_region
      %s41 = ssub.s32 16, 16
      %42 = vsyncadd [#allocation6], %s41
      %s44 = sshll.u32 [#allocation5], 4
      %s45 = int_to_ptr.vmem [resolvable:$true] %s44
      %47 = dma.hbm_to_vmem [thread:$0]  %s5, 16, %s45, [#allocation6]
    $region25: #{tpu_custom_call.1} parent=1 // pred_fallthru
      _
    // Predicated region
    $region26: #{tpu_custom_call.1} parent=1 // pred_check
      _
    $region27: #{tpu_custom_call.1} parent=1 // pred_check_branch
      %49 = sbr.rel (0) target = $region29
    $region28: #{tpu_custom_call.1} parent=1 // pred_region
      _
    $region29: #{tpu_custom_call.1} parent=1 // pred_fallthru
      _
    // Predicated region
    $region30: #{tpu_custom_call.1} parent=1 // pred_check
      _
    $region31: #{tpu_custom_call.1} parent=1 // pred_check_branch
      %51 = sbr.rel (0) target = $region33
    $region32: #{tpu_custom_call.1} parent=1 // pred_region
      _
    $region33: #{tpu_custom_call.1} parent=1 // pred_fallthru
      _
    // Predicated region
    $region34: #{tpu_custom_call.1} parent=1 // pred_check
      _
    $region35: #{tpu_custom_call.1} parent=1 // pred_check_branch
      %53 = sbr.rel (0) target = $region37
    $region36: #{tpu_custom_call.1} parent=1 // pred_region
      %s55 = ssub.s32 256, 256
      %56 = vsyncadd [#allocation6], %s55
      %s57 = sshll.u32 [#allocation7], 4
      %s58 = int_to_ptr.vmem [resolvable:$true] %s57
      %63 = dma.hbm_to_vmem [thread:$0]  %s8, 256, %s58, [#allocation6], 64, 64, 4
    $region37: #{tpu_custom_call.1} parent=1 // pred_fallthru
      _
    // Predicated region
    $region38: #{tpu_custom_call.1} parent=1 // pred_check
      _
    $region39: #{tpu_custom_call.1} parent=1 // pred_check_branch
      %65 = sbr.rel (0) target = $region41
    $region40: #{tpu_custom_call.1} parent=1 // pred_region
      _
    $region41: #{tpu_custom_call.1} parent=1 // pred_fallthru
      _
    // Predicated region
    $region42: #{tpu_custom_call.1} parent=1 // pred_check
      _
    $region43: #{tpu_custom_call.1} parent=1 // pred_check_branch
      %67 = sbr.rel (0) target = $region45
    $region44: #{tpu_custom_call.1} parent=1 // pred_region
      %68 = dma.done [#allocation3], 512
    $region45: #{tpu_custom_call.1} parent=1 // pred_fallthru
      _
    // Predicated region
    $region46: #{tpu_custom_call.1} parent=1 // pred_check
      _
    $region47: #{tpu_custom_call.1} parent=1 // pred_check_branch
      %70 = sbr.rel (0) target = $region49
    $region48: #{tpu_custom_call.1} parent=1 // pred_region
      %71 = dma.done [#allocation6], 16
    $region49: #{tpu_custom_call.1} parent=1 // pred_fallthru
      _
    // Predicated region
    $region50: #{tpu_custom_call.1} parent=1 // pred_check
      _
    $region51: #{tpu_custom_call.1} parent=1 // pred_check_branch
      %73 = sbr.rel (0) target = $region53
    $region52: #{tpu_custom_call.1} parent=1 // pred_region
      %74 = dma.done [#allocation6], 256
    $region53: #{tpu_custom_call.1} parent=1 // pred_fallthru
      _
    %v76 = vld [vmem:[%s0] sm:$0xf]
    %v77 = vld [vmem:[%s0 + $0x4] sm:$0xf]
    %v78 = vld [vmem:[%s0 + $0x8] sm:$0xf]
    %v79 = vld [vmem:[%s0 + $0xc] sm:$0xf]
    %v80 = vld [vmem:[%s0 + $0x10] sm:$0xf]
    %v81 = vld [vmem:[%s0 + $0x14] sm:$0xf]
    %v82 = vld [vmem:[%s0 + $0x18] sm:$0xf]
    %v83 = vld [vmem:[%s0 + $0x1c] sm:$0xf]
    %v84 = vld [vmem:[%s1] sm:$0xff]
    %v85 = vld [vmem:[%s1 + $0x8] sm:$0xff]
    %v86 = vld [vmem:[%s1 + $0x10] sm:$0xff]
    %v87 = vld [vmem:[%s1 + $0x18] sm:$0xff]
    %v88 = vld [vmem:[%s2] sm:$0x3]
    %v90 = vlaneseq
    %v91 = vshrl.u32 %v90, 7
    %v92 = vsub.s32 0, %v91
    %v93 = vrot.slane %v88, %v92
    %v94 = vlaneseq
    %v95 = vshrl.u32 %v94, 7
    %v96 = vsub.s32 1, %v95
    %v97 = vrot.slane %v88, %v96
    %v108 = vunpack.c.l.b16 %v76
    %v109 = vunpack.c.l.b16 %v77
    %v110 = vunpack.c.l.b16 %v78
    %v111 = vunpack.c.l.b16 %v79
    %v112 = vunpack.c.l.b16 %v80
    %v113 = vunpack.c.l.b16 %v81
    %v114 = vunpack.c.l.b16 %v82
    %v115 = vunpack.c.l.b16 %v83
    %v116 = vpack.c.b16 %v109, %v108
    %v117 = vpack.c.b16 %v111, %v110
    %v118 = vpack.c.b16 %v113, %v112
    %v119 = vpack.c.b16 %v115, %v114
    %v124 = vunpack.c.l.b16 %v84
    %v125 = vunpack.c.h.b16 %v84
    %v126 = vunpack.c.l.b16 %v85
    %v127 = vunpack.c.h.b16 %v85
    %v128 = vunpack.c.l.b16 %v86
    %v129 = vunpack.c.h.b16 %v86
    %v130 = vunpack.c.l.b16 %v87
    %v131 = vunpack.c.h.b16 %v87
    %v132 = vpack.c.b16 %v126, %v124
    %v133 = vpack.c.b16 %v127, %v125
    %v134 = vpack.c.b16 %v130, %v128
    %v135 = vpack.c.b16 %v131, %v129
    %vm140 = vcmask 261120
    %v142 = vsel %vm140, %v116, 0
    %v145 = vsel %vm140, %v117, 0
    %v148 = vsel %vm140, %v118, 0
    %v151 = vsel %vm140, %v119, 0
    %153 = vmatprep.subr.bf16.mxu0 %v133
    %154 = vmatpush1.bf16.msra.mxu0 %v132
    %155 = vmatprep.subr.bf16.mxu0 %v135
    %156 = vmatpush1.bf16.msra.mxu0 %v134
    %157 = vmatprep.subr.bf16.mxu0 0
    %158 = vmatpush1.bf16.msra.mxu0 0
    %159 = vmatprep.subr.bf16.mxu0 0
    %160 = vmatpush1.bf16.msra.mxu0 0
    %161 = vmatprep.subr.bf16.mxu0 0
    %162 = vmatpush1.bf16.msra.mxu0 0
    %163 = vmatprep.subr.bf16.mxu0 0
    %164 = vmatpush1.bf16.msra.mxu0 0
    %165 = vmatprep.subr.bf16.mxu0 0
    %166 = vmatpush1.bf16.msra.mxu0 0
    %167 = vmatprep.subr.bf16.mxu0 0
    %168 = vmatpush1.bf16.msra.mxu0 0
    %169 = vmatprep.subr.bf16.mxu0 0
    %170 = vmatpush1.bf16.msra.mxu0 0
    %171 = vmatprep.subr.bf16.mxu0 0
    %172 = vmatpush1.bf16.msra.mxu0 0
    %173 = vmatprep.subr.bf16.mxu0 0
    %174 = vmatpush1.bf16.msra.mxu0 0
    %175 = vmatprep.subr.bf16.mxu0 0
    %176 = vmatpush1.bf16.msra.mxu0 0
    %177 = vmatprep.subr.bf16.mxu0 0
    %178 = vmatpush1.bf16.msra.mxu0 0
    %179 = vmatprep.subr.bf16.mxu0 0
    %180 = vmatpush1.bf16.msra.mxu0 0
    %181 = vmatprep.subr.bf16.mxu0 0
    %182 = vmatpush1.bf16.msra.mxu0 0
    %183 = vmatprep.subr.bf16.mxu0 0
    %184 = vmatpush1.bf16.msra.mxu0 0
    %185 = vmatprep.mubr.bf16.mxu0 0
    %186 = vmatmul.mubr.bf16.gmra.mrb[0].mxu0 %v142
    %v187 = vpop.f32.mrb[0].mxu0
    %v188 = vadd.f32 %v93, %v187
    %v189 = vpop.f32.mrb[0].mxu0
    %v190 = vadd.f32 %v97, %v189
    %v191 = vpop.f32.mrb[0].mxu0
    %v192 = vadd.f32 %v93, %v191
    %v193 = vpop.f32.mrb[0].mxu0
    %v194 = vadd.f32 %v97, %v193
    %195 = vmatprep.mubr.bf16.mxu0 0
    %196 = vmatmul.mubr.bf16.gmra.mrb[0].mxu0 %v145
    %v197 = vpop.f32.mrb[0].mxu0
    %v198 = vadd.f32 %v93, %v197
    %v199 = vpop.f32.mrb[0].mxu0
    %v200 = vadd.f32 %v97, %v199
    %v201 = vpop.f32.mrb[0].mxu0
    %v202 = vadd.f32 %v93, %v201
    %v203 = vpop.f32.mrb[0].mxu0
    %v204 = vadd.f32 %v97, %v203
    %205 = vmatprep.mubr.bf16.mxu0 0
    %206 = vmatmul.mubr.bf16.gmra.mrb[0].mxu0 %v148
    %v207 = vpop.f32.mrb[0].mxu0
    %v208 = vadd.f32 %v93, %v207
    %v209 = vpop.f32.mrb[0].mxu0
    %v210 = vadd.f32 %v97, %v209
    %v211 = vpop.f32.mrb[0].mxu0
    %v212 = vadd.f32 %v93, %v211
    %v213 = vpop.f32.mrb[0].mxu0
    %v214 = vadd.f32 %v97, %v213
    %215 = vmatprep.mubr.bf16.mxu0 0
    %216 = vmatmul.mubr.bf16.gmra.mrb[0].mxu0 %v151
    %v217 = vpop.f32.mrb[0].mxu0
    %v218 = vadd.f32 %v93, %v217
    %v219 = vpop.f32.mrb[0].mxu0
    %v220 = vadd.f32 %v97, %v219
    %v221 = vpop.f32.mrb[0].mxu0
    %v222 = vadd.f32 %v93, %v221
    %v223 = vpop.f32.mrb[0].mxu0
    %v224 = vadd.f32 %v97, %v223
    %225 = vdwg.mxu0
    %v226 = vld [vmem:[%s3] sm:$0xff]
    %v227 = vld [vmem:[%s3 + $0x8] sm:$0xff]
    %v228 = vld [vmem:[%s3 + $0x10] sm:$0xff]
    %v229 = vld [vmem:[%s3 + $0x18] sm:$0xff]
    %v230 = vld [vmem:[%s3 + $0x20] sm:$0xff]
    %v231 = vld [vmem:[%s3 + $0x28] sm:$0xff]
    %v232 = vld [vmem:[%s3 + $0x30] sm:$0xff]
    %v233 = vld [vmem:[%s3 + $0x38] sm:$0xff]
    %v242 = vunpack.c.l.b16 %v226
    %v243 = vunpack.c.h.b16 %v226
    %v244 = vunpack.c.l.b16 %v227
    %v245 = vunpack.c.h.b16 %v227
    %v246 = vunpack.c.l.b16 %v228
    %v247 = vunpack.c.h.b16 %v228
    %v248 = vunpack.c.l.b16 %v229
    %v249 = vunpack.c.h.b16 %v229
    %v250 = vunpack.c.l.b16 %v230
    %v251 = vunpack.c.h.b16 %v230
    %v252 = vunpack.c.l.b16 %v231
    %v253 = vunpack.c.h.b16 %v231
    %v254 = vunpack.c.l.b16 %v232
    %v255 = vunpack.c.h.b16 %v232
    %v256 = vunpack.c.l.b16 %v233
    %v257 = vunpack.c.h.b16 %v233
    %v258 = vpack.c.b16 %v244, %v242
    %v259 = vpack.c.b16 %v245, %v243
    %v260 = vpack.c.b16 %v248, %v246
    %v261 = vpack.c.b16 %v249, %v247
    %v262 = vpack.c.b16 %v252, %v250
    %v263 = vpack.c.b16 %v253, %v251
    %v264 = vpack.c.b16 %v256, %v254
    %v265 = vpack.c.b16 %v257, %v255
    %vm274 = vcmask 523264
    %v276 = vsel %vm274, 0, 0
    %278 = vmatprep.subr.bf16.mxu0 %v259
    %279 = vmatpush1.bf16.msra.mxu0 %v258
    %280 = vmatprep.subr.bf16.mxu0 %v261
    %281 = vmatpush1.bf16.msra.mxu0 %v260
    %282 = vmatprep.subr.bf16.mxu0 %v263
    %283 = vmatpush1.bf16.msra.mxu0 %v262
    %284 = vmatprep.subr.bf16.mxu0 %v265
    %285 = vmatpush1.bf16.msra.mxu0 %v264
    %286 = vmatprep.subr.bf16.mxu0 0
    %287 = vmatpush1.bf16.msra.mxu0 0
    %288 = vmatprep.subr.bf16.mxu0 0
    %289 = vmatpush1.bf16.msra.mxu0 0
    %290 = vmatprep.subr.bf16.mxu0 0
    %291 = vmatpush1.bf16.msra.mxu0 0
    %292 = vmatprep.subr.bf16.mxu0 0
    %293 = vmatpush1.bf16.msra.mxu0 0
    %294 = vmatprep.subr.bf16.mxu0 0
    %295 = vmatpush1.bf16.msra.mxu0 0
    %296 = vmatprep.subr.bf16.mxu0 0
    %297 = vmatpush1.bf16.msra.mxu0 0
    %298 = vmatprep.subr.bf16.mxu0 0
    %299 = vmatpush1.bf16.msra.mxu0 0
    %300 = vmatprep.subr.bf16.mxu0 0
    %301 = vmatpush1.bf16.msra.mxu0 0
    %302 = vmatprep.subr.bf16.mxu0 0
    %303 = vmatpush1.bf16.msra.mxu0 0
    %304 = vmatprep.subr.bf16.mxu0 0
    %305 = vmatpush1.bf16.msra.mxu0 0
    %306 = vmatprep.subr.bf16.mxu0 0
    %307 = vmatpush1.bf16.msra.mxu0 0
    %308 = vmatprep.subr.bf16.mxu0 0
    %309 = vmatpush1.bf16.msra.mxu0 0
    %310 = vmatprep.mubr.bf16.mxu0 0
    %311 = vmatmul.mubr.bf16.gmra.mrb[0].mxu0 %v276
    %v312 = vpop.f32.mrb[0].mxu0
    %v313 = vadd.f32 0.0, %v312
    %v314 = vpop.f32.mrb[0].mxu0
    %v315 = vadd.f32 0.0, %v314
    %v316 = vpop.f32.mrb[0].mxu0
    %v317 = vpop.f32.mrb[0].mxu0
    %318 = vdwg.mxu0
    %v319 = vadd.f32 %v188, %v313
    %v320 = vadd.f32 %v190, %v315
    %v321 = vxor.u32 %v319, 2147483648
    %v322 = vxor.u32 %v320, 2147483648
    %v323 = vmul.f32 %v321, 1.442695
    %v324 = vpow.pop %v323
    %v325 = vmul.f32 %v322, 1.442695
    %v326 = vpow.pop %v325
    %v327 = vadd.f32 %v324, 1.0
    %v328 = vadd.f32 %v326, 1.0
    %v329 = vrcp.pop %v327
    %v330 = vmul.f32 1.0, %v329
    %v331 = vrcp.pop %v328
    %v332 = vmul.f32 1.0, %v331
    %v333 = vtanh.pop %v320
    %v334 = vmul.f32 %v330, 0.0
    %v335 = vmul.f32 %v330, %v333
    %337 = vrot.lane.b32.xlu0 %v335, 64
    %v338 = vpop.permute.xlu0 %337
    %v340 = vadd.f32 %v334, %v338
    %v341 = vtanh.pop %v340
    %v342 = vmul.f32 %v332, %v341
    %v343 = vpack.c.bf16 %v342, %v342
    %345 = vrot.lane.b32.xlu0 %v343, 64
    %v346 = vpop.permute.xlu0 %345
    %v348 = vsel %vm274, %v346, 0
    %350 = vmatprep.subr.bf16.mxu0 %v259
    %351 = vmatpush1.bf16.msra.mxu0 %v258
    %352 = vmatprep.subr.bf16.mxu0 %v261
    %353 = vmatpush1.bf16.msra.mxu0 %v260
    %354 = vmatprep.subr.bf16.mxu0 %v263
    %355 = vmatpush1.bf16.msra.mxu0 %v262
    %356 = vmatprep.subr.bf16.mxu0 %v265
    %357 = vmatpush1.bf16.msra.mxu0 %v264
    %358 = vmatprep.subr.bf16.mxu0 0
    %359 = vmatpush1.bf16.msra.mxu0 0
    %360 = vmatprep.subr.bf16.mxu0 0
    %361 = vmatpush1.bf16.msra.mxu0 0
    %362 = vmatprep.subr.bf16.mxu0 0
    %363 = vmatpush1.bf16.msra.mxu0 0
    %364 = vmatprep.subr.bf16.mxu0 0
    %365 = vmatpush1.bf16.msra.mxu0 0
    %366 = vmatprep.subr.bf16.mxu0 0
    %367 = vmatpush1.bf16.msra.mxu0 0
    %368 = vmatprep.subr.bf16.mxu0 0
    %369 = vmatpush1.bf16.msra.mxu0 0
    %370 = vmatprep.subr.bf16.mxu0 0
    %371 = vmatpush1.bf16.msra.mxu0 0
    %372 = vmatprep.subr.bf16.mxu0 0
    %373 = vmatpush1.bf16.msra.mxu0 0
    %374 = vmatprep.subr.bf16.mxu0 0
    %375 = vmatpush1.bf16.msra.mxu0 0
    %376 = vmatprep.subr.bf16.mxu0 0
    %377 = vmatpush1.bf16.msra.mxu0 0
    %378 = vmatprep.subr.bf16.mxu0 0
    %379 = vmatpush1.bf16.msra.mxu0 0
    %380 = vmatprep.subr.bf16.mxu0 0
    %381 = vmatpush1.bf16.msra.mxu0 0
    %382 = vmatprep.mubr.bf16.mxu0 0
    %383 = vmatmul.mubr.bf16.gmra.mrb[0].mxu0 %v348
    %v384 = vpop.f32.mrb[0].mxu0
    %v385 = vadd.f32 0.0, %v384
    %v386 = vpop.f32.mrb[0].mxu0
    %v387 = vadd.f32 0.0, %v386
    %v388 = vpop.f32.mrb[0].mxu0
    %v389 = vpop.f32.mrb[0].mxu0
    %390 = vdwg.mxu0
    %v391 = vadd.f32 %v192, %v385
    %v392 = vadd.f32 %v194, %v387
    %v393 = vxor.u32 %v391, 2147483648
    %v394 = vxor.u32 %v392, 2147483648
    %v395 = vmul.f32 %v393, 1.442695
    %v396 = vpow.pop %v395
    %v397 = vmul.f32 %v394, 1.442695
    %v398 = vpow.pop %v397
    %v399 = vadd.f32 %v396, 1.0
    %v400 = vadd.f32 %v398, 1.0
    %v401 = vrcp.pop %v399
    %v402 = vmul.f32 1.0, %v401
    %v403 = vrcp.pop %v400
    %v404 = vmul.f32 1.0, %v403
    %v405 = vtanh.pop %v392
    %v406 = vmul.f32 %v402, %v340
    %v407 = vmul.f32 %v402, %v405
    %409 = vrot.lane.b32.xlu0 %v407, 64
    %v410 = vpop.permute.xlu0 %409
    %v412 = vadd.f32 %v406, %v410
    %v413 = vtanh.pop %v412
    %v414 = vmul.f32 %v404, %v413
    %v415 = vpack.c.bf16 %v414, %v414
    %417 = vrot.lane.b32.xlu0 %v415, 64
    %v418 = vpop.permute.xlu0 %417
    %v420 = vsel %vm274, %v418, 0
    %422 = vmatprep.subr.bf16.mxu0 %v259
    %423 = vmatpush1.bf16.msra.mxu0 %v258
    %424 = vmatprep.subr.bf16.mxu0 %v261
    %425 = vmatpush1.bf16.msra.mxu0 %v260
    %426 = vmatprep.subr.bf16.mxu0 %v263
    %427 = vmatpush1.bf16.msra.mxu0 %v262
    %428 = vmatprep.subr.bf16.mxu0 %v265
    %429 = vmatpush1.bf16.msra.mxu0 %v264
    %430 = vmatprep.subr.bf16.mxu0 0
    %431 = vmatpush1.bf16.msra.mxu0 0
    %432 = vmatprep.subr.bf16.mxu0 0
    %433 = vmatpush1.bf16.msra.mxu0 0
    %434 = vmatprep.subr.bf16.mxu0 0
    %435 = vmatpush1.bf16.msra.mxu0 0
    %436 = vmatprep.subr.bf16.mxu0 0
    %437 = vmatpush1.bf16.msra.mxu0 0
    %438 = vmatprep.subr.bf16.mxu0 0
    %439 = vmatpush1.bf16.msra.mxu0 0
    %440 = vmatprep.subr.bf16.mxu0 0
    %441 = vmatpush1.bf16.msra.mxu0 0
    %442 = vmatprep.subr.bf16.mxu0 0
    %443 = vmatpush1.bf16.msra.mxu0 0
    %444 = vmatprep.subr.bf16.mxu0 0
    %445 = vmatpush1.bf16.msra.mxu0 0
    %446 = vmatprep.subr.bf16.mxu0 0
    %447 = vmatpush1.bf16.msra.mxu0 0
    %448 = vmatprep.subr.bf16.mxu0 0
    %449 = vmatpush1.bf16.msra.mxu0 0
    %450 = vmatprep.subr.bf16.mxu0 0
    %451 = vmatpush1.bf16.msra.mxu0 0
    %452 = vmatprep.subr.bf16.mxu0 0
    %453 = vmatpush1.bf16.msra.mxu0 0
    %454 = vmatprep.mubr.bf16.mxu0 0
    %455 = vmatmul.mubr.bf16.gmra.mrb[0].mxu0 %v420
    %v456 = vpop.f32.mrb[0].mxu0
    %v457 = vadd.f32 0.0, %v456
    %v458 = vpop.f32.mrb[0].mxu0
    %v459 = vadd.f32 0.0, %v458
    %v460 = vpop.f32.mrb[0].mxu0
    %v461 = vpop.f32.mrb[0].mxu0
    %462 = vdwg.mxu0
    %v463 = vadd.f32 %v198, %v457
    %v464 = vadd.f32 %v200, %v459
    %v465 = vxor.u32 %v463, 2147483648
    %v466 = vxor.u32 %v464, 2147483648
    %v467 = vmul.f32 %v465, 1.442695
    %v468 = vpow.pop %v467
    %v469 = vmul.f32 %v466, 1.442695
    %v470 = vpow.pop %v469
    %v471 = vadd.f32 %v468, 1.0
    %v472 = vadd.f32 %v470, 1.0
    %v473 = vrcp.pop %v471
    %v474 = vmul.f32 1.0, %v473
    %v475 = vrcp.pop %v472
    %v476 = vmul.f32 1.0, %v475
    %v477 = vtanh.pop %v464
    %v478 = vmul.f32 %v474, %v412
    %v479 = vmul.f32 %v474, %v477
    %481 = vrot.lane.b32.xlu0 %v479, 64
    %v482 = vpop.permute.xlu0 %481
    %v484 = vadd.f32 %v478, %v482
    %v485 = vtanh.pop %v484
    %v486 = vmul.f32 %v476, %v485
    %v487 = vpack.c.bf16 %v486, %v486
    %489 = vrot.lane.b32.xlu0 %v487, 64
    %v490 = vpop.permute.xlu0 %489
    %v492 = vsel %vm274, %v490, 0
    %494 = vmatprep.subr.bf16.mxu0 %v259
    %495 = vmatpush1.bf16.msra.mxu0 %v258
    %496 = vmatprep.subr.bf16.mxu0 %v261
    %497 = vmatpush1.bf16.msra.mxu0 %v260
    %498 = vmatprep.subr.bf16.mxu0 %v263
    %499 = vmatpush1.bf16.msra.mxu0 %v262
    %500 = vmatprep.subr.bf16.mxu0 %v265
    %501 = vmatpush1.bf16.msra.mxu0 %v264
    %502 = vmatprep.subr.bf16.mxu0 0
    %503 = vmatpush1.bf16.msra.mxu0 0
    %504 = vmatprep.subr.bf16.mxu0 0
    %505 = vmatpush1.bf16.msra.mxu0 0
    %506 = vmatprep.subr.bf16.mxu0 0
    %507 = vmatpush1.bf16.msra.mxu0 0
    %508 = vmatprep.subr.bf16.mxu0 0
    %509 = vmatpush1.bf16.msra.mxu0 0
    %510 = vmatprep.subr.bf16.mxu0 0
    %511 = vmatpush1.bf16.msra.mxu0 0
    %512 = vmatprep.subr.bf16.mxu0 0
    %513 = vmatpush1.bf16.msra.mxu0 0
    %514 = vmatprep.subr.bf16.mxu0 0
    %515 = vmatpush1.bf16.msra.mxu0 0
    %516 = vmatprep.subr.bf16.mxu0 0
    %517 = vmatpush1.bf16.msra.mxu0 0
    %518 = vmatprep.subr.bf16.mxu0 0
    %519 = vmatpush1.bf16.msra.mxu0 0
    %520 = vmatprep.subr.bf16.mxu0 0
    %521 = vmatpush1.bf16.msra.mxu0 0
    %522 = vmatprep.subr.bf16.mxu0 0
    %523 = vmatpush1.bf16.msra.mxu0 0
    %524 = vmatprep.subr.bf16.mxu0 0
    %525 = vmatpush1.bf16.msra.mxu0 0
    %526 = vmatprep.mubr.bf16.mxu0 0
    %527 = vmatmul.mubr.bf16.gmra.mrb[0].mxu0 %v492
    %v528 = vpop.f32.mrb[0].mxu0
    %v529 = vadd.f32 0.0, %v528
    %v530 = vpop.f32.mrb[0].mxu0
    %v531 = vadd.f32 0.0, %v530
    %v532 = vpop.f32.mrb[0].mxu0
    %v533 = vpop.f32.mrb[0].mxu0
    %534 = vdwg.mxu0
    %v535 = vadd.f32 %v202, %v529
    %v536 = vadd.f32 %v204, %v531
    %v537 = vxor.u32 %v535, 2147483648
    %v538 = vxor.u32 %v536, 2147483648
    %v539 = vmul.f32 %v537, 1.442695
    %v540 = vpow.pop %v539
    %v541 = vmul.f32 %v538, 1.442695
    %v542 = vpow.pop %v541
    %v543 = vadd.f32 %v540, 1.0
    %v544 = vadd.f32 %v542, 1.0
    %v545 = vrcp.pop %v543
    %v546 = vmul.f32 1.0, %v545
    %v547 = vrcp.pop %v544
    %v548 = vmul.f32 1.0, %v547
    %v549 = vtanh.pop %v536
    %v550 = vmul.f32 %v546, %v484
    %v551 = vmul.f32 %v546, %v549
    %553 = vrot.lane.b32.xlu0 %v551, 64
    %v554 = vpop.permute.xlu0 %553
    %v556 = vadd.f32 %v550, %v554
    %v557 = vtanh.pop %v556
    %v558 = vmul.f32 %v548, %v557
    %v559 = vpack.c.bf16 %v558, %v558
    %561 = vrot.lane.b32.xlu0 %v559, 64
    %v562 = vpop.permute.xlu0 %561
    %v564 = vsel %vm274, %v562, 0
    %566 = vmatprep.subr.bf16.mxu0 %v259
    %567 = vmatpush1.bf16.msra.mxu0 %v258
    %568 = vmatprep.subr.bf16.mxu0 %v261
    %569 = vmatpush1.bf16.msra.mxu0 %v260
    %570 = vmatprep.subr.bf16.mxu0 %v263
    %571 = vmatpush1.bf16.msra.mxu0 %v262
    %572 = vmatprep.subr.bf16.mxu0 %v265
    %573 = vmatpush1.bf16.msra.mxu0 %v264
    %574 = vmatprep.subr.bf16.mxu0 0
    %575 = vmatpush1.bf16.msra.mxu0 0
    %576 = vmatprep.subr.bf16.mxu0 0
    %577 = vmatpush1.bf16.msra.mxu0 0
    %578 = vmatprep.subr.bf16.mxu0 0
    %579 = vmatpush1.bf16.msra.mxu0 0
    %580 = vmatprep.subr.bf16.mxu0 0
    %581 = vmatpush1.bf16.msra.mxu0 0
    %582 = vmatprep.subr.bf16.mxu0 0
    %583 = vmatpush1.bf16.msra.mxu0 0
    %584 = vmatprep.subr.bf16.mxu0 0
    %585 = vmatpush1.bf16.msra.mxu0 0
    %586 = vmatprep.subr.bf16.mxu0 0
    %587 = vmatpush1.bf16.msra.mxu0 0
    %588 = vmatprep.subr.bf16.mxu0 0
    %589 = vmatpush1.bf16.msra.mxu0 0
    %590 = vmatprep.subr.bf16.mxu0 0
    %591 = vmatpush1.bf16.msra.mxu0 0
    %592 = vmatprep.subr.bf16.mxu0 0
    %593 = vmatpush1.bf16.msra.mxu0 0
    %594 = vmatprep.subr.bf16.mxu0 0
    %595 = vmatpush1.bf16.msra.mxu0 0
    %596 = vmatprep.subr.bf16.mxu0 0
    %597 = vmatpush1.bf16.msra.mxu0 0
    %598 = vmatprep.mubr.bf16.mxu0 0
    %599 = vmatmul.mubr.bf16.gmra.mrb[0].mxu0 %v564
    %v600 = vpop.f32.mrb[0].mxu0
    %v601 = vadd.f32 0.0, %v600
    %v602 = vpop.f32.mrb[0].mxu0
    %v603 = vadd.f32 0.0, %v602
    %v604 = vpop.f32.mrb[0].mxu0
    %v605 = vpop.f32.mrb[0].mxu0
    %606 = vdwg.mxu0
    %v607 = vadd.f32 %v208, %v601
    %v608 = vadd.f32 %v210, %v603
    %v609 = vxor.u32 %v607, 2147483648
    %v610 = vxor.u32 %v608, 2147483648
    %v611 = vmul.f32 %v609, 1.442695
    %v612 = vpow.pop %v611
    %v613 = vmul.f32 %v610, 1.442695
    %v614 = vpow.pop %v613
    %v615 = vadd.f32 %v612, 1.0
    %v616 = vadd.f32 %v614, 1.0
    %v617 = vrcp.pop %v615
    %v618 = vmul.f32 1.0, %v617
    %v619 = vrcp.pop %v616
    %v620 = vmul.f32 1.0, %v619
    %v621 = vtanh.pop %v608
    %v622 = vmul.f32 %v618, %v556
    %v623 = vmul.f32 %v618, %v621
    %625 = vrot.lane.b32.xlu0 %v623, 64
    %v626 = vpop.permute.xlu0 %625
    %v628 = vadd.f32 %v622, %v626
    %v629 = vtanh.pop %v628
    %v630 = vmul.f32 %v620, %v629
    %v631 = vpack.c.bf16 %v630, %v630
    %633 = vrot.lane.b32.xlu0 %v631, 64
    %v634 = vpop.permute.xlu0 %633
    %v636 = vsel %vm274, %v634, 0
    %638 = vmatprep.subr.bf16.mxu0 %v259
    %639 = vmatpush1.bf16.msra.mxu0 %v258
    %640 = vmatprep.subr.bf16.mxu0 %v261
    %641 = vmatpush1.bf16.msra.mxu0 %v260
    %642 = vmatprep.subr.bf16.mxu0 %v263
    %643 = vmatpush1.bf16.msra.mxu0 %v262
    %644 = vmatprep.subr.bf16.mxu0 %v265
    %645 = vmatpush1.bf16.msra.mxu0 %v264
    %646 = vmatprep.subr.bf16.mxu0 0
    %647 = vmatpush1.bf16.msra.mxu0 0
    %648 = vmatprep.subr.bf16.mxu0 0
    %649 = vmatpush1.bf16.msra.mxu0 0
    %650 = vmatprep.subr.bf16.mxu0 0
    %651 = vmatpush1.bf16.msra.mxu0 0
    %652 = vmatprep.subr.bf16.mxu0 0
    %653 = vmatpush1.bf16.msra.mxu0 0
    %654 = vmatprep.subr.bf16.mxu0 0
    %655 = vmatpush1.bf16.msra.mxu0 0
    %656 = vmatprep.subr.bf16.mxu0 0
    %657 = vmatpush1.bf16.msra.mxu0 0
    %658 = vmatprep.subr.bf16.mxu0 0
    %659 = vmatpush1.bf16.msra.mxu0 0
    %660 = vmatprep.subr.bf16.mxu0 0
    %661 = vmatpush1.bf16.msra.mxu0 0
    %662 = vmatprep.subr.bf16.mxu0 0
    %663 = vmatpush1.bf16.msra.mxu0 0
    %664 = vmatprep.subr.bf16.mxu0 0
    %665 = vmatpush1.bf16.msra.mxu0 0
    %666 = vmatprep.subr.bf16.mxu0 0
    %667 = vmatpush1.bf16.msra.mxu0 0
    %668 = vmatprep.subr.bf16.mxu0 0
    %669 = vmatpush1.bf16.msra.mxu0 0
    %670 = vmatprep.mubr.bf16.mxu0 0
    %671 = vmatmul.mubr.bf16.gmra.mrb[0].mxu0 %v636
    %v672 = vpop.f32.mrb[0].mxu0
    %v673 = vadd.f32 0.0, %v672
    %v674 = vpop.f32.mrb[0].mxu0
    %v675 = vadd.f32 0.0, %v674
    %v676 = vpop.f32.mrb[0].mxu0
    %v677 = vpop.f32.mrb[0].mxu0
    %678 = vdwg.mxu0
    %v679 = vadd.f32 %v212, %v673
    %v680 = vadd.f32 %v214, %v675
    %v681 = vxor.u32 %v679, 2147483648
    %v682 = vxor.u32 %v680, 2147483648
    %v683 = vmul.f32 %v681, 1.442695
    %v684 = vpow.pop %v683
    %v685 = vmul.f32 %v682, 1.442695
    %v686 = vpow.pop %v685
    %v687 = vadd.f32 %v684, 1.0
    %v688 = vadd.f32 %v686, 1.0
    %v689 = vrcp.pop %v687
    %v690 = vmul.f32 1.0, %v689
    %v691 = vrcp.pop %v688
    %v692 = vmul.f32 1.0, %v691
    %v693 = vtanh.pop %v680
    %v694 = vmul.f32 %v690, %v628
    %v695 = vmul.f32 %v690, %v693
    %697 = vrot.lane.b32.xlu0 %v695, 64
    %v698 = vpop.permute.xlu0 %697
    %v700 = vadd.f32 %v694, %v698
    %v701 = vtanh.pop %v700
    %v702 = vmul.f32 %v692, %v701
    %v703 = vpack.c.bf16 %v702, %v702
    %705 = vrot.lane.b32.xlu0 %v703, 64
    %v706 = vpop.permute.xlu0 %705
    %v708 = vsel %vm274, %v706, 0
    %710 = vmatprep.subr.bf16.mxu0 %v259
    %711 = vmatpush1.bf16.msra.mxu0 %v258
    %712 = vmatprep.subr.bf16.mxu0 %v261
    %713 = vmatpush1.bf16.msra.mxu0 %v260
    %714 = vmatprep.subr.bf16.mxu0 %v263
    %715 = vmatpush1.bf16.msra.mxu0 %v262
    %716 = vmatprep.subr.bf16.mxu0 %v265
    %717 = vmatpush1.bf16.msra.mxu0 %v264
    %718 = vmatprep.subr.bf16.mxu0 0
    %719 = vmatpush1.bf16.msra.mxu0 0
    %720 = vmatprep.subr.bf16.mxu0 0
    %721 = vmatpush1.bf16.msra.mxu0 0
    %722 = vmatprep.subr.bf16.mxu0 0
    %723 = vmatpush1.bf16.msra.mxu0 0
    %724 = vmatprep.subr.bf16.mxu0 0
    %725 = vmatpush1.bf16.msra.mxu0 0
    %726 = vmatprep.subr.bf16.mxu0 0
    %727 = vmatpush1.bf16.msra.mxu0 0
    %728 = vmatprep.subr.bf16.mxu0 0
    %729 = vmatpush1.bf16.msra.mxu0 0
    %730 = vmatprep.subr.bf16.mxu0 0
    %731 = vmatpush1.bf16.msra.mxu0 0
    %732 = vmatprep.subr.bf16.mxu0 0
    %733 = vmatpush1.bf16.msra.mxu0 0
    %734 = vmatprep.subr.bf16.mxu0 0
    %735 = vmatpush1.bf16.msra.mxu0 0
    %736 = vmatprep.subr.bf16.mxu0 0
    %737 = vmatpush1.bf16.msra.mxu0 0
    %738 = vmatprep.subr.bf16.mxu0 0
    %739 = vmatpush1.bf16.msra.mxu0 0
    %740 = vmatprep.subr.bf16.mxu0 0
    %741 = vmatpush1.bf16.msra.mxu0 0
    %742 = vmatprep.mubr.bf16.mxu0 0
    %743 = vmatmul.mubr.bf16.gmra.mrb[0].mxu0 %v708
    %v744 = vpop.f32.mrb[0].mxu0
    %v745 = vadd.f32 0.0, %v744
    %v746 = vpop.f32.mrb[0].mxu0
    %v747 = vadd.f32 0.0, %v746
    %v748 = vpop.f32.mrb[0].mxu0
    %v749 = vpop.f32.mrb[0].mxu0
    %750 = vdwg.mxu0
    %v751 = vadd.f32 %v218, %v745
    %v752 = vadd.f32 %v220, %v747
    %v753 = vxor.u32 %v751, 2147483648
    %v754 = vxor.u32 %v752, 2147483648
    %v755 = vmul.f32 %v753, 1.442695
    %v756 = vpow.pop %v755
    %v757 = vmul.f32 %v754, 1.442695
    %v758 = vpow.pop %v757
    %v759 = vadd.f32 %v756, 1.0
    %v760 = vadd.f32 %v758, 1.0
    %v761 = vrcp.pop %v759
    %v762 = vmul.f32 1.0, %v761
    %v763 = vrcp.pop %v760
    %v764 = vmul.f32 1.0, %v763
    %v765 = vtanh.pop %v752
    %v766 = vmul.f32 %v762, %v700
    %v767 = vmul.f32 %v762, %v765
    %769 = vrot.lane.b32.xlu0 %v767, 64
    %v770 = vpop.permute.xlu0 %769
    %v772 = vadd.f32 %v766, %v770
    %v773 = vtanh.pop %v772
    %v774 = vmul.f32 %v764, %v773
    %v775 = vpack.c.bf16 %v774, %v774
    %777 = vrot.lane.b32.xlu0 %v775, 64
    %v778 = vpop.permute.xlu0 %777
    %v780 = vsel %vm274, %v778, 0
    %782 = vmatprep.subr.bf16.mxu0 %v259
    %783 = vmatpush1.bf16.msra.mxu0 %v258
    %784 = vmatprep.subr.bf16.mxu0 %v261
    %785 = vmatpush1.bf16.msra.mxu0 %v260
    %786 = vmatprep.subr.bf16.mxu0 %v263
    %787 = vmatpush1.bf16.msra.mxu0 %v262
    %788 = vmatprep.subr.bf16.mxu0 %v265
    %789 = vmatpush1.bf16.msra.mxu0 %v264
    %790 = vmatprep.subr.bf16.mxu0 0
    %791 = vmatpush1.bf16.msra.mxu0 0
    %792 = vmatprep.subr.bf16.mxu0 0
    %793 = vmatpush1.bf16.msra.mxu0 0
    %794 = vmatprep.subr.bf16.mxu0 0
    %795 = vmatpush1.bf16.msra.mxu0 0
    %796 = vmatprep.subr.bf16.mxu0 0
    %797 = vmatpush1.bf16.msra.mxu0 0
    %798 = vmatprep.subr.bf16.mxu0 0
    %799 = vmatpush1.bf16.msra.mxu0 0
    %800 = vmatprep.subr.bf16.mxu0 0
    %801 = vmatpush1.bf16.msra.mxu0 0
    %802 = vmatprep.subr.bf16.mxu0 0
    %803 = vmatpush1.bf16.msra.mxu0 0
    %804 = vmatprep.subr.bf16.mxu0 0
    %805 = vmatpush1.bf16.msra.mxu0 0
    %806 = vmatprep.subr.bf16.mxu0 0
    %807 = vmatpush1.bf16.msra.mxu0 0
    %808 = vmatprep.subr.bf16.mxu0 0
    %809 = vmatpush1.bf16.msra.mxu0 0
    %810 = vmatprep.subr.bf16.mxu0 0
    %811 = vmatpush1.bf16.msra.mxu0 0
    %812 = vmatprep.subr.bf16.mxu0 0
    %813 = vmatpush1.bf16.msra.mxu0 0
    %814 = vmatprep.mubr.bf16.mxu0 0
    %815 = vmatmul.mubr.bf16.gmra.mrb[0].mxu0 %v780
    %v816 = vpop.f32.mrb[0].mxu0
    %v817 = vadd.f32 0.0, %v816
    %v818 = vpop.f32.mrb[0].mxu0
    %v819 = vadd.f32 0.0, %v818
    %v820 = vpop.f32.mrb[0].mxu0
    %v821 = vpop.f32.mrb[0].mxu0
    %822 = vdwg.mxu0
    %v823 = vadd.f32 %v222, %v817
    %v824 = vadd.f32 %v224, %v819
    %v825 = vxor.u32 %v823, 2147483648
    %v826 = vxor.u32 %v824, 2147483648
    %v827 = vmul.f32 %v825, 1.442695
    %v828 = vpow.pop %v827
    %v829 = vmul.f32 %v826, 1.442695
    %v830 = vpow.pop %v829
    %v831 = vadd.f32 %v828, 1.0
    %v832 = vadd.f32 %v830, 1.0
    %v833 = vrcp.pop %v831
    %v834 = vmul.f32 1.0, %v833
    %v835 = vrcp.pop %v832
    %v836 = vmul.f32 1.0, %v835
    %v837 = vtanh.pop %v824
    %v838 = vmul.f32 %v834, %v772
    %v839 = vmul.f32 %v834, %v837
    %841 = vrot.lane.b32.xlu0 %v839, 64
    %v842 = vpop.permute.xlu0 %841
    %v844 = vadd.f32 %v838, %v842
    %v845 = vtanh.pop %v844
    %v846 = vmul.f32 %v836, %v845
    %v847 = vpack.c.bf16 %v846, %v846
    %v848 = vld [vmem:[#allocation2] sm:$0xf]
    %v849 = vld [vmem:[#allocation2 + $0x4] sm:$0xf]
    %v850 = vld [vmem:[#allocation2 + $0x8] sm:$0xf]
    %v851 = vld [vmem:[#allocation2 + $0xc] sm:$0xf]
    %v852 = vld [vmem:[#allocation2 + $0x10] sm:$0xf]
    %v853 = vld [vmem:[#allocation2 + $0x14] sm:$0xf]
    %v854 = vld [vmem:[#allocation2 + $0x18] sm:$0xf]
    %v855 = vld [vmem:[#allocation2 + $0x1c] sm:$0xf]
    %v856 = vld [vmem:[#allocation5] sm:$0x1]
    %v858 = vlaneseq
    %v859 = vshrl.u32 %v858, 7
    %v860 = vsub.s32 0, %v859
    %v861 = vrot.slane %v856, %v860
    %864 = vrot.lane.b32.xlu0 %v847, 64
    %v865 = vpop.permute.xlu0 %864
    %v874 = vunpack.c.l.b16 %v848
    %v875 = vunpack.c.l.b16 %v849
    %v876 = vunpack.c.l.b16 %v850
    %v877 = vunpack.c.l.b16 %v851
    %v878 = vunpack.c.l.b16 %v852
    %v879 = vunpack.c.l.b16 %v853
    %v880 = vunpack.c.l.b16 %v854
    %v881 = vunpack.c.l.b16 %v855
    %v882 = vpack.c.b16 %v875, %v874
    %v883 = vpack.c.b16 %v877, %v876
    %v884 = vpack.c.b16 %v879, %v878
    %v885 = vpack.c.b16 %v881, %v880
    %v891 = vsel %vm274, %v865, 0
    %893 = vmatprep.subr.bf16.mxu0 0
    %894 = vmatpush1.bf16.msra.mxu0 %v882
    %895 = vmatprep.subr.bf16.mxu0 0
    %896 = vmatpush1.bf16.msra.mxu0 %v883
    %897 = vmatprep.subr.bf16.mxu0 0
    %898 = vmatpush1.bf16.msra.mxu0 %v884
    %899 = vmatprep.subr.bf16.mxu0 0
    %900 = vmatpush1.bf16.msra.mxu0 %v885
    %901 = vmatprep.subr.bf16.mxu0 0
    %902 = vmatpush1.bf16.msra.mxu0 0
    %903 = vmatprep.subr.bf16.mxu0 0
    %904 = vmatpush1.bf16.msra.mxu0 0
    %905 = vmatprep.subr.bf16.mxu0 0
    %906 = vmatpush1.bf16.msra.mxu0 0
    %907 = vmatprep.subr.bf16.mxu0 0
    %908 = vmatpush1.bf16.msra.mxu0 0
    %909 = vmatprep.subr.bf16.mxu0 0
    %910 = vmatpush1.bf16.msra.mxu0 0
    %911 = vmatprep.subr.bf16.mxu0 0
    %912 = vmatpush1.bf16.msra.mxu0 0
    %913 = vmatprep.subr.bf16.mxu0 0
    %914 = vmatpush1.bf16.msra.mxu0 0
    %915 = vmatprep.subr.bf16.mxu0 0
    %916 = vmatpush1.bf16.msra.mxu0 0
    %917 = vmatprep.subr.bf16.mxu0 0
    %918 = vmatpush1.bf16.msra.mxu0 0
    %919 = vmatprep.subr.bf16.mxu0 0
    %920 = vmatpush1.bf16.msra.mxu0 0
    %921 = vmatprep.subr.bf16.mxu0 0
    %922 = vmatpush1.bf16.msra.mxu0 0
    %923 = vmatprep.subr.bf16.mxu0 0
    %924 = vmatpush1.bf16.msra.mxu0 0
    %925 = vmatprep.mubr.bf16.mxu0 0
    %926 = vmatmul.mubr.bf16.gmra.mrb[0].mxu0 %v891
    %v927 = vpop.f32.mrb[0].mxu0
    %v928 = vadd.f32 %v861, %v927
    %v929 = vpop.f32.mrb[0].mxu0
    %v930 = vpop.f32.mrb[0].mxu0
    %v931 = vpop.f32.mrb[0].mxu0
    %932 = vdwg.mxu0
    %v933 = vmax.f32 %v928, 0.0
    %v934 = vpack.c.bf16 %v933, %v933
    %v935 = vld [vmem:[%s6] sm:$0xf]
    %v936 = vld [vmem:[%s6 + $0x4] sm:$0xf]
    %v937 = vld [vmem:[%s6 + $0x8] sm:$0xf]
    %v938 = vld [vmem:[%s6 + $0xc] sm:$0xf]
    %v939 = vld [vmem:[%s6 + $0x10] sm:$0xf]
    %v940 = vld [vmem:[%s6 + $0x14] sm:$0xf]
    %v941 = vld [vmem:[%s6 + $0x18] sm:$0xf]
    %v942 = vld [vmem:[%s6 + $0x1c] sm:$0xf]
    %v943 = vld [vmem:[%s7] sm:$0x1]
    %v945 = vlaneseq
    %v946 = vshrl.u32 %v945, 7
    %v947 = vsub.s32 0, %v946
    %v948 = vrot.slane %v943, %v947
    %v958 = vunpack.c.l.b16 %v935
    %v959 = vunpack.c.l.b16 %v936
    %v960 = vunpack.c.l.b16 %v937
    %v961 = vunpack.c.l.b16 %v938
    %v962 = vunpack.c.l.b16 %v939
    %v963 = vunpack.c.l.b16 %v940
    %v964 = vunpack.c.l.b16 %v941
    %v965 = vunpack.c.l.b16 %v942
    %v966 = vpack.c.b16 %v959, %v958
    %v967 = vpack.c.b16 %v961, %v960
    %v968 = vpack.c.b16 %v963, %v962
    %v969 = vpack.c.b16 %v965, %v964
    %v975 = vsel %vm274, %v934, 0
    %977 = vmatprep.subr.bf16.mxu0 0
    %978 = vmatpush1.bf16.msra.mxu0 %v966
    %979 = vmatprep.subr.bf16.mxu0 0
    %980 = vmatpush1.bf16.msra.mxu0 %v967
    %981 = vmatprep.subr.bf16.mxu0 0
    %982 = vmatpush1.bf16.msra.mxu0 %v968
    %983 = vmatprep.subr.bf16.mxu0 0
    %984 = vmatpush1.bf16.msra.mxu0 %v969
    %985 = vmatprep.subr.bf16.mxu0 0
    %986 = vmatpush1.bf16.msra.mxu0 0
    %987 = vmatprep.subr.bf16.mxu0 0
    %988 = vmatpush1.bf16.msra.mxu0 0
    %989 = vmatprep.subr.bf16.mxu0 0
    %990 = vmatpush1.bf16.msra.mxu0 0
    %991 = vmatprep.subr.bf16.mxu0 0
    %992 = vmatpush1.bf16.msra.mxu0 0
    %993 = vmatprep.subr.bf16.mxu0 0
    %994 = vmatpush1.bf16.msra.mxu0 0
    %995 = vmatprep.subr.bf16.mxu0 0
    %996 = vmatpush1.bf16.msra.mxu0 0
    %997 = vmatprep.subr.bf16.mxu0 0
    %998 = vmatpush1.bf16.msra.mxu0 0
    %999 = vmatprep.subr.bf16.mxu0 0
    %1000 = vmatpush1.bf16.msra.mxu0 0
    %1001 = vmatprep.subr.bf16.mxu0 0
    %1002 = vmatpush1.bf16.msra.mxu0 0
    %1003 = vmatprep.subr.bf16.mxu0 0
    %1004 = vmatpush1.bf16.msra.mxu0 0
    %1005 = vmatprep.subr.bf16.mxu0 0
    %1006 = vmatpush1.bf16.msra.mxu0 0
    %1007 = vmatprep.subr.bf16.mxu0 0
    %1008 = vmatpush1.bf16.msra.mxu0 0
    %1009 = vmatprep.mubr.bf16.mxu0 0
    %1010 = vmatmul.mubr.bf16.gmra.mrb[0].mxu0 %v975
    %v1011 = vpop.f32.mrb[0].mxu0
    %v1012 = vadd.f32 %v948, %v1011
    %v1013 = vpop.f32.mrb[0].mxu0
    %v1014 = vpop.f32.mrb[0].mxu0
    %v1015 = vpop.f32.mrb[0].mxu0
    %1016 = vdwg.mxu0
    %v1017 = vmax.f32 %v1012, 0.0
    %v1018 = vpack.c.bf16 %v1017, %v1017
    %v1019 = vld [vmem:[#allocation7] sm:$0xf]
    %v1020 = vld [vmem:[#allocation7 + $0x4] sm:$0xf]
    %v1021 = vld [vmem:[#allocation7 + $0x8] sm:$0xf]
    %v1022 = vld [vmem:[#allocation7 + $0xc] sm:$0xf]
    %v1023 = vld [vmem:[%s9] sm:$0x1]
    %v1025 = vlaneseq
    %v1026 = vshrl.u32 %v1025, 7
    %v1027 = vsub.s32 0, %v1026
    %v1028 = vrot.slane %v1023, %v1027
    %v1034 = vunpack.c.l.b16 %v1019
    %v1035 = vunpack.c.l.b16 %v1020
    %v1036 = vunpack.c.l.b16 %v1021
    %v1037 = vunpack.c.l.b16 %v1022
    %v1038 = vpack.c.b16 %v1035, %v1034
    %v1039 = vpack.c.b16 %v1037, %v1036
    %v1043 = vsel %vm140, %v1018, 0
    %1045 = vmatprep.subr.bf16.mxu0 0
    %1046 = vmatpush1.bf16.msra.mxu0 %v1038
    %1047 = vmatprep.subr.bf16.mxu0 0
    %1048 = vmatpush1.bf16.msra.mxu0 %v1039
    %1049 = vmatprep.subr.bf16.mxu0 0
    %1050 = vmatpush1.bf16.msra.mxu0 0
    %1051 = vmatprep.subr.bf16.mxu0 0
    %1052 = vmatpush1.bf16.msra.mxu0 0
    %1053 = vmatprep.subr.bf16.mxu0 0
    %1054 = vmatpush1.bf16.msra.mxu0 0
    %1055 = vmatprep.subr.bf16.mxu0 0
    %1056 = vmatpush1.bf16.msra.mxu0 0
    %1057 = vmatprep.subr.bf16.mxu0 0
    %1058 = vmatpush1.bf16.msra.mxu0 0
    %1059 = vmatprep.subr.bf16.mxu0 0
    %1060 = vmatpush1.bf16.msra.mxu0 0
    %1061 = vmatprep.subr.bf16.mxu0 0
    %1062 = vmatpush1.bf16.msra.mxu0 0
    %1063 = vmatprep.subr.bf16.mxu0 0
    %1064 = vmatpush1.bf16.msra.mxu0 0
    %1065 = vmatprep.subr.bf16.mxu0 0
    %1066 = vmatpush1.bf16.msra.mxu0 0
    %1067 = vmatprep.subr.bf16.mxu0 0
    %1068 = vmatpush1.bf16.msra.mxu0 0
    %1069 = vmatprep.subr.bf16.mxu0 0
    %1070 = vmatpush1.bf16.msra.mxu0 0
    %1071 = vmatprep.subr.bf16.mxu0 0
    %1072 = vmatpush1.bf16.msra.mxu0 0
    %1073 = vmatprep.subr.bf16.mxu0 0
    %1074 = vmatpush1.bf16.msra.mxu0 0
    %1075 = vmatprep.subr.bf16.mxu0 0
    %1076 = vmatpush1.bf16.msra.mxu0 0
    %1077 = vmatprep.mubr.bf16.mxu0 0
    %1078 = vmatmul.mubr.bf16.gmra.mrb[0].mxu0 %v1043
    %v1079 = vpop.f32.mrb[0].mxu0
    %v1080 = vadd.f32 %v1028, %v1079
    %v1081 = vpop.f32.mrb[0].mxu0
    %v1082 = vpop.f32.mrb[0].mxu0
    %v1083 = vpop.f32.mrb[0].mxu0
    %1084 = vdwg.mxu0
    %1085 = vst [vmem:[#allocation8] sm:$0xff] %v1080
    // Predicated region
    $region54: #{tpu_custom_call.1} parent=1 // pred_check
      _
    $region55: #{tpu_custom_call.1} parent=1 // pred_check_branch
      %1087 = sbr.rel (0) target = $region57
    $region56: #{tpu_custom_call.1} parent=1 // pred_region
      %s1089 = ssub.s32 128, 128
      %1090 = vsyncadd [#allocation4], %s1089
      %s1092 = sshll.u32 [#allocation8], 4
      %s1093 = int_to_ptr.vmem [resolvable:$true] %s1092
      %1095 = dma.vmem_to_hbm [thread:$0]  %s1093, 128, %s10, [#allocation4]
    $region57: #{tpu_custom_call.1} parent=1 // pred_fallthru
      _
    // Predicated region
    $region58: #{tpu_custom_call.1} parent=1 // pred_check
      _
    $region59: #{tpu_custom_call.1} parent=1 // pred_check_branch
      %1097 = sbr.rel (0) target = $region61
    $region60: #{tpu_custom_call.1} parent=1 // pred_region
      %1098 = dma.done [#allocation4], 128
    $region61: #{tpu_custom_call.1} parent=1 // pred_fallthru
      _
    %1099 = vsyncpa [#allocation3], 1
    %1100 = vsyncpa [#allocation6], 1
    %1101 = vsyncpa [#allocation4], 1

</llo_original>
